<compile_context>
chip_gen: v7x
topology: tpu7x:2x2x1
jax: 0.10.0
libtpu: 0.0.40
codegen_flags: <defaults>
</compile_context>

<pallas_src>
import jax
import jax.numpy as jnp
from jax.experimental import pallas as pl
from jax.experimental.pallas import tpu as pltpu

# ----- model config (MXU / (8,128)-friendly feature dims) -----
PATCH = 8            # patch size
D_MODEL = 128        # transformer width (simplified to a single patch-embed layer)
EMBED = 128          # shared CLIP embedding dim
VOCAB = 32           # toy vocabulary
VOCAB_PAD = 128      # lane-dense padded vocab for the counts @ embed matmul
EPS = 1e-12          # F.normalize-style eps
# NOTE: PyTorch F.normalize uses x / max(||x||, eps); rsqrt(sum+eps) differs
# only for near-zero-norm embeddings.


def _choose_tile_b(batch):
    """Largest multiple-of-16 batch tile (<=128) that still leaves >=2 grid
    steps once the batch is big enough (v7x megacore); floor at 16 so every
    bf16 block stays sublane-packing aligned."""
    for t in (128, 64, 32, 16):
        if batch >= 2 * t:
            return t
    return 16


def _vmem_limit_bytes():
    """Generation-aware scoped-VMEM limit: ~3/4 of physical VMEM
    (v5e/v6e 128 MiB -> 96 MiB, v7x 64 MiB -> 48 MiB)."""
    try:
        cap = int(pltpu.get_tpu_info().vmem_capacity_bytes)
        if cap <= 0:
            raise ValueError
    except Exception:
        cap = 64 * 1024 * 1024
    return (cap * 3) // 4


VMEM_LIMIT_BYTES = _vmem_limit_bytes()


# --------------------------------------------------------------------------
# Fused image + text tower kernel (one grid step = TILE_B images / captions)
# --------------------------------------------------------------------------
def _clip_towers_kernel(patches_ref, w_patch_ref, b_patch_ref, pool_ref,
                        w_imgp_ref, counts_ref, tok_emb_ref, w_txtp_ref,
                        img_out_ref, txt_out_ref):
    # patches_ref: [TILE_B*N, Dp] bf16     w_patch_ref: [Dp, D] bf16
    # b_patch_ref: [1, D] f32              pool_ref:    [TILE_B, TILE_B*N] bf16
    # w_imgp_ref:  [D, E] bf16
    # counts_ref:  [TILE_B, VOCAB_PAD] bf16 (already divided by seq length)
    # tok_emb_ref: [VOCAB_PAD, D] bf16     w_txtp_ref:  [D, E] bf16

    # ---------------- image tower ----------------
    # One 2D matmul over all patches of the tile fills the MXU M dimension.
    h = jnp.dot(patches_ref[...], w_patch_ref[...],
                preferred_element_type=jnp.float32)          # [TB*N, D] f32
    h = h + b_patch_ref[...]                                  # broadcast bias
    # tanh-approx GELU lowers to EUP; f32 elementwise (v5e-safe).
    h = jax.nn.gelu(h, approximate=True)

    # Mean-pool over the N patches of each image as a bf16 pooling matmul
    # (pool matrix is grid-invariant, built in the wrapper; f32 accumulation).
    pooled = jnp.dot(pool_ref[...], h.astype(jnp.bfloat16),
                     preferred_element_type=jnp.float32)      # [TB, D]

    z = jnp.dot(pooled.astype(jnp.bfloat16), w_imgp_ref[...],
                preferred_element_type=jnp.float32)           # [TB, E]
    inv = jax.lax.rsqrt(jnp.sum(z * z, axis=-1, keepdims=True) + EPS)
    img_out_ref[...] = z * inv                                # L2-normalized

    # ---------------- text tower ----------------
    # mean over tokens == (counts / L) @ tok_embed  (mean is linear, exact)
    pooled_t = jnp.dot(counts_ref[...], tok_emb_ref[...],
                       preferred_element_type=jnp.float32)    # [TB, D]
    zt = jnp.dot(pooled_t.astype(jnp.bfloat16), w_txtp_ref[...],
                 preferred_element_type=jnp.float32)          # [TB, E]
    inv_t = jax.lax.rsqrt(jnp.sum(zt * zt, axis=-1, keepdims=True) + EPS)
    txt_out_ref[...] = zt * inv_t                             # L2-normalized


# --------------------------------------------------------------------------
# Wrapper (glue): params, patch extraction, token counts, pallas_call
# --------------------------------------------------------------------------
def init_params(key, channels):
    dp = channels * PATCH * PATCH
    k1, k2, k3, k4 = jax.random.split(key, 4)
    return {
        "w_patch": (jax.random.normal(k1, (dp, D_MODEL), jnp.float32)
                    * (1.0 / jnp.sqrt(dp))),
        "b_patch": jnp.zeros((1, D_MODEL), jnp.float32),
        "w_img_proj": (jax.random.normal(k2, (D_MODEL, EMBED), jnp.float32)
                       * (1.0 / jnp.sqrt(D_MODEL))),
        "tok_embed": (jax.random.normal(k3, (VOCAB, D_MODEL), jnp.float32)
                      * 0.02),
        "w_txt_proj": (jax.random.normal(k4, (D_MODEL, EMBED), jnp.float32)
                       * (1.0 / jnp.sqrt(D_MODEL))),
        # CLIP init: log(1/0.07)
        "logit_scale": jnp.full((1, 1), jnp.log(1.0 / 0.07), jnp.float32),
    }


@jax.jit
def biomedclip_forward(images, text_tokens, params):
    B, C, H, W = images.shape
    nH, nW = H // PATCH, W // PATCH
    N = nH * nW
    Dp = C * PATCH * PATCH
    L = text_tokens.shape[1]

    TILE_B = _choose_tile_b(B)
    B_pad = ((B + TILE_B - 1) // TILE_B) * TILE_B
    n_tiles = B_pad // TILE_B

    # bf16 cast BEFORE the patch-extraction transpose (halves the HBM bytes
    # moved by this full-tensor XLA glue round trip).
    # TODO(synk): at real BiomedCLIP sizes verify this reshape+transpose fuses
    # into the input DMA (or move patch extraction into the BlockSpec grid).
    imgs = images.astype(jnp.bfloat16)
    patches = imgs.reshape(B, C, nH, PATCH, nW, PATCH)
    patches = patches.transpose(0, 2, 4, 1, 3, 5).reshape(B, N, Dp)
    patches = jnp.pad(patches, ((0, B_pad - B), (0, 0), (0, 0)))
    patches2d = patches.reshape(B_pad * N, Dp)                # [B_pad*N, Dp] bf16

    # Grid-invariant mean-pool matrix: pool[r, c] = 1/N iff patch c belongs to
    # image r of the tile. Built once host-side, resident in VMEM (constant
    # index_map), bf16 so the pooling matmul is a single-pass MXU op.
    row = jax.lax.broadcasted_iota(jnp.int32, (TILE_B, TILE_B * N), 0)
    col = jax.lax.broadcasted_iota(jnp.int32, (TILE_B, TILE_B * N), 1)
    pool = jnp.where(col // N == row, 1.0 / N, 0.0).astype(jnp.bfloat16)

    # Replace the token-embedding gather with normalized one-hot counts; the
    # in-kernel counts @ tok_embed matmul is an exact mean-pool.
    # TODO(synk): at real BiomedCLIP vocab (~30K) replace with a scalar-prefetch
    # / pl.Element row gather (or leave the lookup in XLA) — this path is
    # O(B*V*D) and only cheap at VOCAB_PAD=128.
    counts = jax.nn.one_hot(text_tokens, VOCAB_PAD, dtype=jnp.float32)
    counts = counts.sum(axis=1) / jnp.float32(L)              # [B, VOCAB_PAD]
    counts = jnp.pad(counts, ((0, B_pad - B), (0, 0))).astype(jnp.bfloat16)

    # bf16 MXU weights (accumulation stays f32 inside the kernel).
    w_patch = params["w_patch"].astype(jnp.bfloat16)
    w_imgp = params["w_img_proj"].astype(jnp.bfloat16)
    w_txtp = params["w_txt_proj"].astype(jnp.bfloat16)
    tok_embed = jnp.pad(params["tok_embed"],
                        ((0, VOCAB_PAD - VOCAB), (0, 0))).astype(jnp.bfloat16)

    img_emb, txt_emb = pl.pallas_call(
        _clip_towers_kernel,
        out_shape=(jax.ShapeDtypeStruct((B_pad, EMBED), jnp.float32),
                   jax.ShapeDtypeStruct((B_pad, EMBED), jnp.float32)),
        grid=(n_tiles,),
        in_specs=[
            pl.BlockSpec((TILE_B * N, Dp), lambda i: (i, 0)),       # patches
            pl.BlockSpec((Dp, D_MODEL), lambda i: (0, 0)),          # w_patch
            pl.BlockSpec((1, D_MODEL), lambda i: (0, 0)),           # b_patch
            pl.BlockSpec((TILE_B, TILE_B * N), lambda i: (0, 0)),   # pool
            pl.BlockSpec((D_MODEL, EMBED), lambda i: (0, 0)),       # w_img_proj
            pl.BlockSpec((TILE_B, VOCAB_PAD), lambda i: (i, 0)),    # counts
            pl.BlockSpec((VOCAB_PAD, D_MODEL), lambda i: (0, 0)),   # tok_embed
            pl.BlockSpec((D_MODEL, EMBED), lambda i: (0, 0)),       # w_txt_proj
        ],
        out_specs=(
            pl.BlockSpec((TILE_B, EMBED), lambda i: (i, 0)),
            pl.BlockSpec((TILE_B, EMBED), lambda i: (i, 0)),
        ),
        compiler_params=pltpu.CompilerParams(
            dimension_semantics=("parallel",),       # megacore batch sharding
            vmem_limit_bytes=VMEM_LIMIT_BYTES),
    )(patches2d, w_patch, params["b_patch"], pool, w_imgp,
      counts, tok_embed, w_txtp)

    # logit_scale.exp() is a single scalar op — keep it out of the kernel.
    logit_scale = jnp.exp(params["logit_scale"][0, 0])

    return img_emb[:B], txt_emb[:B], logit_scale


if __name__ == "__main__":
    key = jax.random.PRNGKey(0)
    k_img, k_txt, k_par = jax.random.split(key, 3)

    B, C, H, W = 2, 4, 16, 16
    L = 8
    images = jax.random.normal(k_img, (B, C, H, W), jnp.float32)
    text_tokens = jax.random.randint(k_txt, (B, L), 0, VOCAB, jnp.int32)

    params = init_params(k_par, C)

    image_emb, text_emb, logit_scale = biomedclip_forward(
        images, text_tokens, params)
    jax.block_until_ready((image_emb, text_emb, logit_scale))

    assert image_emb.shape == (B, EMBED)
    assert text_emb.shape == (B, EMBED)
    assert logit_scale.shape == ()
    print("KERNEL_OK")
</pallas_src>

<mosaic_0001>
module attributes {stable_mosaic.version = 11 : i64} {
  func.func @_clip_towers_kernel(%arg0: i32, %arg1: memref<64x256xbf16, #tpu.memory_space<vmem>>, %arg2: memref<256x128xbf16, #tpu.memory_space<vmem>>, %arg3: memref<1x128xf32, #tpu.memory_space<vmem>>, %arg4: memref<16x64xbf16, #tpu.memory_space<vmem>>, %arg5: memref<128x128xbf16, #tpu.memory_space<vmem>>, %arg6: memref<16x128xbf16, #tpu.memory_space<vmem>>, %arg7: memref<128x128xbf16, #tpu.memory_space<vmem>>, %arg8: memref<128x128xbf16, #tpu.memory_space<vmem>>, %arg9: memref<16x128xf32, #tpu.memory_space<vmem>>, %arg10: memref<16x128xf32, #tpu.memory_space<vmem>>) attributes {dimension_semantics = [#tpu.dimension_semantics<parallel>], iteration_bounds = array<i64: 1>, scalar_prefetch = 0 : i64, scratch_operands = 0 : i64, tpu.core_type = #tpu.core_type<tc>, window_params = [{transform_indices = @transform_0, window_bounds = array<i64: 64, 256>}, {pipeline_mode = #tpu.pipeline_mode<synchronous>, transform_indices = @transform_1, window_bounds = array<i64: 256, 128>}, {pipeline_mode = #tpu.pipeline_mode<synchronous>, transform_indices = @transform_2, window_bounds = array<i64: 1, 128>}, {pipeline_mode = #tpu.pipeline_mode<synchronous>, transform_indices = @transform_3, window_bounds = array<i64: 16, 64>}, {pipeline_mode = #tpu.pipeline_mode<synchronous>, transform_indices = @transform_4, window_bounds = array<i64: 128, 128>}, {transform_indices = @transform_5, window_bounds = array<i64: 16, 128>}, {pipeline_mode = #tpu.pipeline_mode<synchronous>, transform_indices = @transform_6, window_bounds = array<i64: 128, 128>}, {pipeline_mode = #tpu.pipeline_mode<synchronous>, transform_indices = @transform_7, window_bounds = array<i64: 128, 128>}, {transform_indices = @transform_8, window_bounds = array<i64: 16, 128>}, {transform_indices = @transform_9, window_bounds = array<i64: 16, 128>}]} {
    %c0 = arith.constant 0 : index
    %c0_0 = arith.constant 0 : index
    %0 = vector.load %arg1[%c0, %c0_0] : memref<64x256xbf16, #tpu.memory_space<vmem>>, vector<64x256xbf16>
    %c0_1 = arith.constant 0 : index
    %c0_2 = arith.constant 0 : index
    %1 = vector.load %arg2[%c0_1, %c0_2] : memref<256x128xbf16, #tpu.memory_space<vmem>>, vector<256x128xbf16>
    %cst = arith.constant dense<0.000000e+00> : vector<64x128xf32>
    %2 = tpu.matmul %0, %1, %cst {dimension_numbers = #tpu.dot_dimension_numbers<[1], [0], [0], [1], [0, 0, 1, 1], [], []>} : vector<64x256xbf16>, vector<256x128xbf16>, vector<64x128xf32> -> vector<64x128xf32>
    %c0_3 = arith.constant 0 : index
    %c0_4 = arith.constant 0 : index
    %3 = vector.load %arg3[%c0_3, %c0_4] : memref<1x128xf32, #tpu.memory_space<vmem>>, vector<1x128xf32>
    %4 = vector.broadcast %3 : vector<1x128xf32> to vector<64x128xf32>
    %5 = arith.addf %2, %4 : vector<64x128xf32>
    %6 = arith.mulf %5, %5 : vector<64x128xf32>
    %7 = arith.mulf %5, %6 : vector<64x128xf32>
    %cst_5 = arith.constant 4.471500e-02 : f32
    %8 = vector.broadcast %cst_5 : f32 to vector<64x128xf32>
    %9 = arith.mulf %8, %7 : vector<64x128xf32>
    %10 = arith.addf %5, %9 : vector<64x128xf32>
    %cst_6 = arith.constant 0.797884583 : f32
    %11 = vector.broadcast %cst_6 : f32 to vector<64x128xf32>
    %12 = arith.mulf %11, %10 : vector<64x128xf32>
    %13 = math.tanh %12 : vector<64x128xf32>
    %cst_7 = arith.constant 1.000000e+00 : f32
    %14 = vector.broadcast %cst_7 : f32 to vector<64x128xf32>
    %15 = arith.addf %14, %13 : vector<64x128xf32>
    %cst_8 = arith.constant 5.000000e-01 : f32
    %16 = vector.broadcast %cst_8 : f32 to vector<64x128xf32>
    %17 = arith.mulf %16, %15 : vector<64x128xf32>
    %18 = arith.mulf %5, %17 : vector<64x128xf32>
    %c0_9 = arith.constant 0 : index
    %c0_10 = arith.constant 0 : index
    %19 = vector.load %arg4[%c0_9, %c0_10] : memref<16x64xbf16, #tpu.memory_space<vmem>>, vector<16x64xbf16>
    %20 = arith.truncf %18 : vector<64x128xf32> to vector<64x128xbf16>
    %cst_11 = arith.constant dense<0.000000e+00> : vector<16x128xf32>
    %21 = tpu.matmul %19, %20, %cst_11 {dimension_numbers = #tpu.dot_dimension_numbers<[1], [0], [0], [1], [0, 0, 1, 1], [], []>} : vector<16x64xbf16>, vector<64x128xbf16>, vector<16x128xf32> -> vector<16x128xf32>
    %22 = arith.truncf %21 : vector<16x128xf32> to vector<16x128xbf16>
    %c0_12 = arith.constant 0 : index
    %c0_13 = arith.constant 0 : index
    %23 = vector.load %arg5[%c0_12, %c0_13] : memref<128x128xbf16, #tpu.memory_space<vmem>>, vector<128x128xbf16>
    %cst_14 = arith.constant dense<0.000000e+00> : vector<16x128xf32>
    %24 = tpu.matmul %22, %23, %cst_14 {dimension_numbers = #tpu.dot_dimension_numbers<[1], [0], [0], [1], [0, 0, 1, 1], [], []>} : vector<16x128xbf16>, vector<128x128xbf16>, vector<16x128xf32> -> vector<16x128xf32>
    %25 = arith.mulf %24, %24 : vector<16x128xf32>
    %cst_15 = arith.constant dense<0.000000e+00> : vector<16xf32>
    %26 = vector.multi_reduction <add>, %25, %cst_15 [1] : vector<16x128xf32> to vector<16xf32>
    %27 = vector.shape_cast %26 : vector<16xf32> to vector<16x1xf32>
    %cst_16 = arith.constant 9.99999996E-13 : f32
    %28 = vector.broadcast %cst_16 : f32 to vector<16x1xf32>
    %29 = arith.addf %27, %28 : vector<16x1xf32>
    %30 = math.rsqrt %29 : vector<16x1xf32>
    %31 = vector.broadcast %30 : vector<16x1xf32> to vector<16x128xf32>
    %32 = arith.mulf %24, %31 : vector<16x128xf32>
    %c0_17 = arith.constant 0 : index
    %c0_18 = arith.constant 0 : index
    %33 = vector.load %arg9[%c0_17, %c0_18] : memref<16x128xf32, #tpu.memory_space<vmem>>, vector<16x128xf32>
    tpu.vector_store %arg9[%c0_17, %c0_18], %32 {strides = array<i32>} : memref<16x128xf32, #tpu.memory_space<vmem>>, vector<16x128xf32>,
    %c0_19 = arith.constant 0 : index
    %c0_20 = arith.constant 0 : index
    %34 = vector.load %arg6[%c0_19, %c0_20] : memref<16x128xbf16, #tpu.memory_space<vmem>>, vector<16x128xbf16>
    %c0_21 = arith.constant 0 : index
    %c0_22 = arith.constant 0 : index
    %35 = vector.load %arg7[%c0_21, %c0_22] : memref<128x128xbf16, #tpu.memory_space<vmem>>, vector<128x128xbf16>
    %cst_23 = arith.constant dense<0.000000e+00> : vector<16x128xf32>
    %36 = tpu.matmul %34, %35, %cst_23 {dimension_numbers = #tpu.dot_dimension_numbers<[1], [0], [0], [1], [0, 0, 1, 1], [], []>} : vector<16x128xbf16>, vector<128x128xbf16>, vector<16x128xf32> -> vector<16x128xf32>
    %37 = arith.truncf %36 : vector<16x128xf32> to vector<16x128xbf16>
    %c0_24 = arith.constant 0 : index
    %c0_25 = arith.constant 0 : index
    %38 = vector.load %arg8[%c0_24, %c0_25] : memref<128x128xbf16, #tpu.memory_space<vmem>>, vector<128x128xbf16>
    %cst_26 = arith.constant dense<0.000000e+00> : vector<16x128xf32>
    %39 = tpu.matmul %37, %38, %cst_26 {dimension_numbers = #tpu.dot_dimension_numbers<[1], [0], [0], [1], [0, 0, 1, 1], [], []>} : vector<16x128xbf16>, vector<128x128xbf16>, vector<16x128xf32> -> vector<16x128xf32>
    %40 = arith.mulf %39, %39 : vector<16x128xf32>
    %cst_27 = arith.constant dense<0.000000e+00> : vector<16xf32>
    %41 = vector.multi_reduction <add>, %40, %cst_27 [1] : vector<16x128xf32> to vector<16xf32>
    %42 = vector.shape_cast %41 : vector<16xf32> to vector<16x1xf32>
    %cst_28 = arith.constant 9.99999996E-13 : f32
    %43 = vector.broadcast %cst_28 : f32 to vector<16x1xf32>
    %44 = arith.addf %42, %43 : vector<16x1xf32>
    %45 = math.rsqrt %44 : vector<16x1xf32>
    %46 = vector.broadcast %45 : vector<16x1xf32> to vector<16x128xf32>
    %47 = arith.mulf %39, %46 : vector<16x128xf32>
    %c0_29 = arith.constant 0 : index
    %c0_30 = arith.constant 0 : index
    %48 = vector.load %arg10[%c0_29, %c0_30] : memref<16x128xf32, #tpu.memory_space<vmem>>, vector<16x128xf32>
    tpu.vector_store %arg10[%c0_29, %c0_30], %47 {strides = array<i32>} : memref<16x128xf32, #tpu.memory_space<vmem>>, vector<16x128xf32>,
    return
  }
  func.func @transform_0(%arg0: i32) -> (i32, i32) {
    %c0_i32 = arith.constant 0 : i32
    %c0_i32_0 = arith.constant 0 : i32
    return %arg0, %c0_i32 : i32, i32
  }
  func.func @transform_1(%arg0: i32) -> (i32, i32) {
    %c0_i32 = arith.constant 0 : i32
    %c0_i32_0 = arith.constant 0 : i32
    %c0_i32_1 = arith.constant 0 : i32
    return %c0_i32, %c0_i32_0 : i32, i32
  }
  func.func @transform_2(%arg0: i32) -> (i32, i32) {
    %c0_i32 = arith.constant 0 : i32
    %c0_i32_0 = arith.constant 0 : i32
    %c0_i32_1 = arith.constant 0 : i32
    return %c0_i32, %c0_i32_0 : i32, i32
  }
  func.func @transform_3(%arg0: i32) -> (i32, i32) {
    %c0_i32 = arith.constant 0 : i32
    %c0_i32_0 = arith.constant 0 : i32
    %c0_i32_1 = arith.constant 0 : i32
    return %c0_i32, %c0_i32_0 : i32, i32
  }
  func.func @transform_4(%arg0: i32) -> (i32, i32) {
    %c0_i32 = arith.constant 0 : i32
    %c0_i32_0 = arith.constant 0 : i32
    %c0_i32_1 = arith.constant 0 : i32
    return %c0_i32, %c0_i32_0 : i32, i32
  }
  func.func @transform_5(%arg0: i32) -> (i32, i32) {
    %c0_i32 = arith.constant 0 : i32
    %c0_i32_0 = arith.constant 0 : i32
    return %arg0, %c0_i32 : i32, i32
  }
  func.func @transform_6(%arg0: i32) -> (i32, i32) {
    %c0_i32 = arith.constant 0 : i32
    %c0_i32_0 = arith.constant 0 : i32
    %c0_i32_1 = arith.constant 0 : i32
    return %c0_i32, %c0_i32_0 : i32, i32
  }
  func.func @transform_7(%arg0: i32) -> (i32, i32) {
    %c0_i32 = arith.constant 0 : i32
    %c0_i32_0 = arith.constant 0 : i32
    %c0_i32_1 = arith.constant 0 : i32
    return %c0_i32, %c0_i32_0 : i32, i32
  }
  func.func @transform_8(%arg0: i32) -> (i32, i32) {
    %c0_i32 = arith.constant 0 : i32
    %c0_i32_0 = arith.constant 0 : i32
    return %arg0, %c0_i32 : i32, i32
  }
  func.func @transform_9(%arg0: i32) -> (i32, i32) {
    %c0_i32 = arith.constant 0 : i32
    %c0_i32_0 = arith.constant 0 : i32
    return %arg0, %c0_i32 : i32, i32
  }
}

</mosaic_0001>

<llo_original>
// kernel: biomedclip_forward.1
$region0: #{biomedclip_forward.1}
  #allocation0 [shape = 'u32[]', space=smem, size = 0x4, offset = 0x4, fixed_abs, tag = 'smem constant byte address 0x4 - core index']
  #allocation1 [shape = 'u32[144,128]{1,0:T(1,128)}', space=vmem, size = 0x12000, scoped, tag = 'internal scratch']
  %s0 = inlined_call_operand.vmem [shape: bf16[64,256], index: 0, kind: input, shape index: {}]
  %s1 = inlined_call_operand.vmem [shape: bf16[256,128], index: 1, kind: input, shape index: {}]
  %s2 = inlined_call_operand.vmem [shape: f32[1,128], index: 2, kind: input, shape index: {}]
  %s3 = inlined_call_operand.vmem [shape: bf16[16,64], index: 3, kind: input, shape index: {}]
  %s4 = inlined_call_operand.vmem [shape: bf16[128,128], index: 4, kind: input, shape index: {}]
  %s5 = inlined_call_operand.vmem [shape: bf16[16,128], index: 5, kind: input, shape index: {}]
  %s6 = inlined_call_operand.vmem [shape: bf16[128,128], index: 6, kind: input, shape index: {}]
  %s7 = inlined_call_operand.vmem [shape: bf16[128,128], index: 7, kind: input, shape index: {}]
  %s8 = inlined_call_operand.vmem [shape: f32[16,128], index: 8, kind: output, shape index: {0}]
  %s9 = inlined_call_operand.vmem [shape: f32[16,128], index: 9, kind: output, shape index: {1}]
  %10 = xla_tuple %s8, %s9
  %s11 = sld [smem:[#allocation0]]
  $region50: #{biomedclip_forward.1} parent=0
    _
  %s13 = ssub.s32 1, %s11
  %s14 = scalar_select 0, %s13, %s11
  // Predicated region
  $region2: #{biomedclip_forward.1} parent=0 // pred_check
    _
  $region3: #{biomedclip_forward.1} parent=0 // pred_check_branch
    %16 = sbr.rel (0) target = $region5
  $region4: #{biomedclip_forward.1} parent=0 // pred_region
    _
  $region5: #{biomedclip_forward.1} parent=0 // pred_fallthru
    _
  // Predicated region
  $region6: #{biomedclip_forward.1} parent=0 // pred_check
    _
  $region7: #{biomedclip_forward.1} parent=0 // pred_check_branch
    %18 = sbr.rel (0) target = $region9
  $region8: #{biomedclip_forward.1} parent=0 // pred_region
    _
  $region9: #{biomedclip_forward.1} parent=0 // pred_fallthru
    _
  // Predicated region
  $region10: #{biomedclip_forward.1} parent=0 // pred_check
    _
  $region11: #{biomedclip_forward.1} parent=0 // pred_check_branch
    %20 = sbr.rel (0) target = $region13
  $region12: #{biomedclip_forward.1} parent=0 // pred_region
    _
  $region13: #{biomedclip_forward.1} parent=0 // pred_fallthru
    _
  // Predicated region
  $region14: #{biomedclip_forward.1} parent=0 // pred_check
    _
  $region15: #{biomedclip_forward.1} parent=0 // pred_check_branch
    %22 = sbr.rel (0) target = $region17
  $region16: #{biomedclip_forward.1} parent=0 // pred_region
    _
  $region17: #{biomedclip_forward.1} parent=0 // pred_fallthru
    _
  // Predicated region
  $region18: #{biomedclip_forward.1} parent=0 // pred_check
    _
  $region19: #{biomedclip_forward.1} parent=0 // pred_check_branch
    %24 = sbr.rel (0) target = $region21
  $region20: #{biomedclip_forward.1} parent=0 // pred_region
    _
  $region21: #{biomedclip_forward.1} parent=0 // pred_fallthru
    _
  // Predicated region
  $region22: #{biomedclip_forward.1} parent=0 // pred_check
    _
  $region23: #{biomedclip_forward.1} parent=0 // pred_check_branch
    %26 = sbr.rel (0) target = $region25
  $region24: #{biomedclip_forward.1} parent=0 // pred_region
    _
  $region25: #{biomedclip_forward.1} parent=0 // pred_fallthru
    _
  // Predicated region
  $region26: #{biomedclip_forward.1} parent=0 // pred_check
    _
  $region27: #{biomedclip_forward.1} parent=0 // pred_check_branch
    %28 = sbr.rel (0) target = $region29
  $region28: #{biomedclip_forward.1} parent=0 // pred_region
    _
  $region29: #{biomedclip_forward.1} parent=0 // pred_fallthru
    _
  // Predicated region
  $region30: #{biomedclip_forward.1} parent=0 // pred_check
    _
  $region31: #{biomedclip_forward.1} parent=0 // pred_check_branch
    %30 = sbr.rel (0) target = $region33
  $region32: #{biomedclip_forward.1} parent=0 // pred_region
    _
  $region33: #{biomedclip_forward.1} parent=0 // pred_fallthru
    _
  %v32 = vld [vmem:[%s0] sm:$0xff]
  %v33 = vld [vmem:[%s0 + $0x8] sm:$0xff]
  %v34 = vld [vmem:[%s0 + $0x10] sm:$0xff]
  %v35 = vld [vmem:[%s0 + $0x18] sm:$0xff]
  %v36 = vld [vmem:[%s0 + $0x20] sm:$0xff]
  %v37 = vld [vmem:[%s0 + $0x28] sm:$0xff]
  %v38 = vld [vmem:[%s0 + $0x30] sm:$0xff]
  %v39 = vld [vmem:[%s0 + $0x38] sm:$0xff]
  %v40 = vld [vmem:[%s1] sm:$0xf]
  %v41 = vld [vmem:[%s1 + $0x4] sm:$0xf]
  %v42 = vld [vmem:[%s1 + $0x8] sm:$0xf]
  %v43 = vld [vmem:[%s1 + $0xc] sm:$0xf]
  %v44 = vld [vmem:[%s1 + $0x10] sm:$0xf]
  %v45 = vld [vmem:[%s1 + $0x14] sm:$0xf]
  %v46 = vld [vmem:[%s1 + $0x18] sm:$0xf]
  %v47 = vld [vmem:[%s1 + $0x1c] sm:$0xf]
  %v48 = vld [vmem:[%s1 + $0x20] sm:$0xf]
  %v49 = vld [vmem:[%s1 + $0x24] sm:$0xf]
  %v50 = vld [vmem:[%s1 + $0x28] sm:$0xf]
  %v51 = vld [vmem:[%s1 + $0x2c] sm:$0xf]
  %v52 = vld [vmem:[%s1 + $0x30] sm:$0xf]
  %v53 = vld [vmem:[%s1 + $0x34] sm:$0xf]
  %v54 = vld [vmem:[%s1 + $0x38] sm:$0xf]
  %v55 = vld [vmem:[%s1 + $0x3c] sm:$0xf]
  %v56 = vld [vmem:[%s1 + $0x40] sm:$0xf]
  %v57 = vld [vmem:[%s1 + $0x44] sm:$0xf]
  %v58 = vld [vmem:[%s1 + $0x48] sm:$0xf]
  %v59 = vld [vmem:[%s1 + $0x4c] sm:$0xf]
  %v60 = vld [vmem:[%s1 + $0x50] sm:$0xf]
  %v61 = vld [vmem:[%s1 + $0x54] sm:$0xf]
  %v62 = vld [vmem:[%s1 + $0x58] sm:$0xf]
  %v63 = vld [vmem:[%s1 + $0x5c] sm:$0xf]
  %v64 = vld [vmem:[%s1 + $0x60] sm:$0xf]
  %v65 = vld [vmem:[%s1 + $0x64] sm:$0xf]
  %v66 = vld [vmem:[%s1 + $0x68] sm:$0xf]
  %v67 = vld [vmem:[%s1 + $0x6c] sm:$0xf]
  %v68 = vld [vmem:[%s1 + $0x70] sm:$0xf]
  %v69 = vld [vmem:[%s1 + $0x74] sm:$0xf]
  %v70 = vld [vmem:[%s1 + $0x78] sm:$0xf]
  %v71 = vld [vmem:[%s1 + $0x7c] sm:$0xf]
  %v72 = vld [vmem:[%s2] sm:$0x1]
  %v74 = vlaneseq
  %v75 = vshrl.u32 %v74, 7
  %v76 = vsub.s32 0, %v75
  %v77 = vrot.slane %v72, %v76
  %v87 = vunpack.c.l.b16 %v32
  %v88 = vunpack.c.h.b16 %v32
  %v89 = vunpack.c.l.b16 %v33
  %v90 = vunpack.c.h.b16 %v33
  %v91 = vunpack.c.l.b16 %v34
  %v92 = vunpack.c.h.b16 %v34
  %v93 = vunpack.c.l.b16 %v35
  %v94 = vunpack.c.h.b16 %v35
  %v95 = vunpack.c.l.b16 %v36
  %v96 = vunpack.c.h.b16 %v36
  %v97 = vunpack.c.l.b16 %v37
  %v98 = vunpack.c.h.b16 %v37
  %v99 = vunpack.c.l.b16 %v38
  %v100 = vunpack.c.h.b16 %v38
  %v101 = vunpack.c.l.b16 %v39
  %v102 = vunpack.c.h.b16 %v39
  %v103 = vpack.c.b16 %v89, %v87
  %v104 = vpack.c.b16 %v90, %v88
  %v105 = vpack.c.b16 %v93, %v91
  %v106 = vpack.c.b16 %v94, %v92
  %v107 = vpack.c.b16 %v97, %v95
  %v108 = vpack.c.b16 %v98, %v96
  %v109 = vpack.c.b16 %v101, %v99
  %v110 = vpack.c.b16 %v102, %v100
  %v151 = vunpack.c.l.b16 %v40
  %v152 = vunpack.c.l.b16 %v41
  %v153 = vunpack.c.l.b16 %v42
  %v154 = vunpack.c.l.b16 %v43
  %v155 = vunpack.c.l.b16 %v44
  %v156 = vunpack.c.l.b16 %v45
  %v157 = vunpack.c.l.b16 %v46
  %v158 = vunpack.c.l.b16 %v47
  %v159 = vunpack.c.l.b16 %v48
  %v160 = vunpack.c.l.b16 %v49
  %v161 = vunpack.c.l.b16 %v50
  %v162 = vunpack.c.l.b16 %v51
  %v163 = vunpack.c.l.b16 %v52
  %v164 = vunpack.c.l.b16 %v53
  %v165 = vunpack.c.l.b16 %v54
  %v166 = vunpack.c.l.b16 %v55
  %v167 = vunpack.c.l.b16 %v56
  %v168 = vunpack.c.l.b16 %v57
  %v169 = vunpack.c.l.b16 %v58
  %v170 = vunpack.c.l.b16 %v59
  %v171 = vunpack.c.l.b16 %v60
  %v172 = vunpack.c.l.b16 %v61
  %v173 = vunpack.c.l.b16 %v62
  %v174 = vunpack.c.l.b16 %v63
  %v175 = vunpack.c.l.b16 %v64
  %v176 = vunpack.c.l.b16 %v65
  %v177 = vunpack.c.l.b16 %v66
  %v178 = vunpack.c.l.b16 %v67
  %v179 = vunpack.c.l.b16 %v68
  %v180 = vunpack.c.l.b16 %v69
  %v181 = vunpack.c.l.b16 %v70
  %v182 = vunpack.c.l.b16 %v71
  %v183 = vpack.c.b16 %v152, %v151
  %v184 = vpack.c.b16 %v154, %v153
  %v185 = vpack.c.b16 %v156, %v155
  %v186 = vpack.c.b16 %v158, %v157
  %v187 = vpack.c.b16 %v160, %v159
  %v188 = vpack.c.b16 %v162, %v161
  %v189 = vpack.c.b16 %v164, %v163
  %v190 = vpack.c.b16 %v166, %v165
  %v191 = vpack.c.b16 %v168, %v167
  %v192 = vpack.c.b16 %v170, %v169
  %v193 = vpack.c.b16 %v172, %v171
  %v194 = vpack.c.b16 %v174, %v173
  %v195 = vpack.c.b16 %v176, %v175
  %v196 = vpack.c.b16 %v178, %v177
  %v197 = vpack.c.b16 %v180, %v179
  %v198 = vpack.c.b16 %v182, %v181
  %215 = vmatprep.subr.bf16.mxu0 0
  %216 = vmatpush1.bf16.msra.mxu0 %v183
  %217 = vmatprep.subr.bf16.mxu0 0
  %218 = vmatpush1.bf16.msra.mxu0 %v184
  %219 = vmatprep.subr.bf16.mxu0 0
  %220 = vmatpush1.bf16.msra.mxu0 %v185
  %221 = vmatprep.subr.bf16.mxu0 0
  %222 = vmatpush1.bf16.msra.mxu0 %v186
  %223 = vmatprep.subr.bf16.mxu0 0
  %224 = vmatpush1.bf16.msra.mxu0 %v187
  %225 = vmatprep.subr.bf16.mxu0 0
  %226 = vmatpush1.bf16.msra.mxu0 %v188
  %227 = vmatprep.subr.bf16.mxu0 0
  %228 = vmatpush1.bf16.msra.mxu0 %v189
  %229 = vmatprep.subr.bf16.mxu0 0
  %230 = vmatpush1.bf16.msra.mxu0 %v190
  %231 = vmatprep.subr.bf16.mxu0 0
  %232 = vmatpush1.bf16.msra.mxu0 %v191
  %233 = vmatprep.subr.bf16.mxu0 0
  %234 = vmatpush1.bf16.msra.mxu0 %v192
  %235 = vmatprep.subr.bf16.mxu0 0
  %236 = vmatpush1.bf16.msra.mxu0 %v193
  %237 = vmatprep.subr.bf16.mxu0 0
  %238 = vmatpush1.bf16.msra.mxu0 %v194
  %239 = vmatprep.subr.bf16.mxu0 0
  %240 = vmatpush1.bf16.msra.mxu0 %v195
  %241 = vmatprep.subr.bf16.mxu0 0
  %242 = vmatpush1.bf16.msra.mxu0 %v196
  %243 = vmatprep.subr.bf16.mxu0 0
  %244 = vmatpush1.bf16.msra.mxu0 %v197
  %245 = vmatprep.subr.bf16.mxu0 0
  %246 = vmatpush1.bf16.msra.mxu0 %v198
  %247 = vmatprep.mubr.bf16.mxu0 %v104
  %248 = vmatmul.mubr.bf16.gmra.mrb[0].mxu0 %v103
  %v249 = vpop.f32.mrb[0].mxu0
  %v250 = vadd.f32 %v77, %v249
  %v251 = vpop.f32.mrb[0].mxu0
  %v252 = vpop.f32.mrb[0].mxu0
  %v253 = vadd.f32 %v77, %v252
  %v254 = vpop.f32.mrb[0].mxu0
  %255 = vmatprep.mubr.bf16.mxu0 %v106
  %256 = vmatmul.mubr.bf16.gmra.mrb[0].mxu0 %v105
  %v257 = vpop.f32.mrb[0].mxu0
  %v258 = vadd.f32 %v77, %v257
  %v259 = vpop.f32.mrb[0].mxu0
  %v260 = vpop.f32.mrb[0].mxu0
  %v261 = vadd.f32 %v77, %v260
  %v262 = vpop.f32.mrb[0].mxu0
  %263 = vmatprep.mubr.bf16.mxu0 %v108
  %264 = vmatmul.mubr.bf16.gmra.mrb[0].mxu0 %v107
  %v265 = vpop.f32.mrb[0].mxu0
  %v266 = vadd.f32 %v77, %v265
  %v267 = vpop.f32.mrb[0].mxu0
  %v268 = vpop.f32.mrb[0].mxu0
  %v269 = vadd.f32 %v77, %v268
  %v270 = vpop.f32.mrb[0].mxu0
  %271 = vmatprep.mubr.bf16.mxu0 %v110
  %272 = vmatmul.mubr.bf16.gmra.mrb[0].mxu0 %v109
  %v273 = vpop.f32.mrb[0].mxu0
  %v274 = vadd.f32 %v77, %v273
  %v275 = vpop.f32.mrb[0].mxu0
  %v276 = vpop.f32.mrb[0].mxu0
  %v277 = vadd.f32 %v77, %v276
  %v278 = vpop.f32.mrb[0].mxu0
  %279 = vdwg.mxu0
  %v280 = vmul.f32 %v250, %v250
  %v281 = vmul.f32 %v253, %v253
  %v282 = vmul.f32 %v258, %v258
  %v283 = vmul.f32 %v261, %v261
  %v284 = vmul.f32 %v266, %v266
  %v285 = vmul.f32 %v269, %v269
  %v286 = vmul.f32 %v274, %v274
  %v287 = vmul.f32 %v277, %v277
  %v288 = vmul.f32 %v250, %v280
  %v289 = vmul.f32 %v253, %v281
  %v290 = vmul.f32 %v258, %v282
  %v291 = vmul.f32 %v261, %v283
  %v292 = vmul.f32 %v266, %v284
  %v293 = vmul.f32 %v269, %v285
  %v294 = vmul.f32 %v274, %v286
  %v295 = vmul.f32 %v277, %v287
  %v296 = vmul.f32 %v288, 0.044715
  %v297 = vmul.f32 %v289, 0.044715
  %v298 = vmul.f32 %v290, 0.044715
  %v299 = vmul.f32 %v291, 0.044715
  %v300 = vmul.f32 %v292, 0.044715
  %v301 = vmul.f32 %v293, 0.044715
  %v302 = vmul.f32 %v294, 0.044715
  %v303 = vmul.f32 %v295, 0.044715
  %v304 = vadd.f32 %v250, %v296
  %v305 = vadd.f32 %v253, %v297
  %v306 = vadd.f32 %v258, %v298
  %v307 = vadd.f32 %v261, %v299
  %v308 = vadd.f32 %v266, %v300
  %v309 = vadd.f32 %v269, %v301
  %v310 = vadd.f32 %v274, %v302
  %v311 = vadd.f32 %v277, %v303
  %v312 = vmul.f32 %v304, 0.7978846
  %v313 = vmul.f32 %v305, 0.7978846
  %v314 = vmul.f32 %v306, 0.7978846
  %v315 = vmul.f32 %v307, 0.7978846
  %v316 = vmul.f32 %v308, 0.7978846
  %v317 = vmul.f32 %v309, 0.7978846
  %v318 = vmul.f32 %v310, 0.7978846
  %v319 = vmul.f32 %v311, 0.7978846
  %v320 = vtanh.pop %v312
  %v321 = vtanh.pop %v313
  %v322 = vtanh.pop %v314
  %v323 = vtanh.pop %v315
  %v324 = vtanh.pop %v316
  %v325 = vtanh.pop %v317
  %v326 = vtanh.pop %v318
  %v327 = vtanh.pop %v319
  %v328 = vadd.f32 %v320, 1.0
  %v329 = vadd.f32 %v321, 1.0
  %v330 = vadd.f32 %v322, 1.0
  %v331 = vadd.f32 %v323, 1.0
  %v332 = vadd.f32 %v324, 1.0
  %v333 = vadd.f32 %v325, 1.0
  %v334 = vadd.f32 %v326, 1.0
  %v335 = vadd.f32 %v327, 1.0
  %v336 = vmul.f32 %v328, 0.5
  %v337 = vmul.f32 %v329, 0.5
  %v338 = vmul.f32 %v330, 0.5
  %v339 = vmul.f32 %v331, 0.5
  %v340 = vmul.f32 %v332, 0.5
  %v341 = vmul.f32 %v333, 0.5
  %v342 = vmul.f32 %v334, 0.5
  %v343 = vmul.f32 %v335, 0.5
  %v344 = vmul.f32 %v250, %v336
  %v345 = vmul.f32 %v253, %v337
  %v346 = vmul.f32 %v258, %v338
  %v347 = vmul.f32 %v261, %v339
  %v348 = vmul.f32 %v266, %v340
  %v349 = vmul.f32 %v269, %v341
  %v350 = vmul.f32 %v274, %v342
  %v351 = vmul.f32 %v277, %v343
  %v352 = vld [vmem:[%s3] sm:$0xf]
  %v353 = vld [vmem:[%s3 + $0x4] sm:$0xf]
  %v354 = vpack.c.bf16 %v345, %v344
  %v355 = vpack.c.bf16 %v347, %v346
  %v356 = vpack.c.bf16 %v349, %v348
  %v357 = vpack.c.bf16 %v351, %v350
  %v360 = vunpack.c.l.b16 %v352
  %v361 = vunpack.c.l.b16 %v353
  %v362 = vpack.c.b16 %v361, %v360
  %vm363 = vcmask 523264
  %v365 = vsel %vm363, %v362, 0
  %367 = vmatprep.subr.bf16.mxu0 0
  %368 = vmatpush1.bf16.msra.mxu0 %v354
  %369 = vmatprep.subr.bf16.mxu0 0
  %370 = vmatpush1.bf16.msra.mxu0 %v355
  %371 = vmatprep.subr.bf16.mxu0 0
  %372 = vmatpush1.bf16.msra.mxu0 %v356
  %373 = vmatprep.subr.bf16.mxu0 0
  %374 = vmatpush1.bf16.msra.mxu0 %v357
  %375 = vmatprep.subr.bf16.mxu0 0
  %376 = vmatpush1.bf16.msra.mxu0 0
  %377 = vmatprep.subr.bf16.mxu0 0
  %378 = vmatpush1.bf16.msra.mxu0 0
  %379 = vmatprep.subr.bf16.mxu0 0
  %380 = vmatpush1.bf16.msra.mxu0 0
  %381 = vmatprep.subr.bf16.mxu0 0
  %382 = vmatpush1.bf16.msra.mxu0 0
  %383 = vmatprep.subr.bf16.mxu0 0
  %384 = vmatpush1.bf16.msra.mxu0 0
  %385 = vmatprep.subr.bf16.mxu0 0
  %386 = vmatpush1.bf16.msra.mxu0 0
  %387 = vmatprep.subr.bf16.mxu0 0
  %388 = vmatpush1.bf16.msra.mxu0 0
  %389 = vmatprep.subr.bf16.mxu0 0
  %390 = vmatpush1.bf16.msra.mxu0 0
  %391 = vmatprep.subr.bf16.mxu0 0
  %392 = vmatpush1.bf16.msra.mxu0 0
  %393 = vmatprep.subr.bf16.mxu0 0
  %394 = vmatpush1.bf16.msra.mxu0 0
  %395 = vmatprep.subr.bf16.mxu0 0
  %396 = vmatpush1.bf16.msra.mxu0 0
  %397 = vmatprep.subr.bf16.mxu0 0
  %398 = vmatpush1.bf16.msra.mxu0 0
  %399 = vmatprep.mubr.bf16.mxu0 0
  %400 = vmatmul.mubr.bf16.gmra.mrb[0].mxu0 %v365
  %v401 = vpop.f32.mrb[0].mxu0
  %v402 = vadd.f32 0.0, %v401
  %v403 = vpop.f32.mrb[0].mxu0
  %v404 = vpop.f32.mrb[0].mxu0
  %v405 = vadd.f32 0.0, %v404
  %v406 = vpop.f32.mrb[0].mxu0
  %407 = vdwg.mxu0
  %v408 = vpack.c.bf16 %v405, %v402
  %v409 = vld [vmem:[%s4] sm:$0xf]
  %v410 = vld [vmem:[%s4 + $0x4] sm:$0xf]
  %v411 = vld [vmem:[%s4 + $0x8] sm:$0xf]
  %v412 = vld [vmem:[%s4 + $0xc] sm:$0xf]
  %v413 = vld [vmem:[%s4 + $0x10] sm:$0xf]
  %v414 = vld [vmem:[%s4 + $0x14] sm:$0xf]
  %v415 = vld [vmem:[%s4 + $0x18] sm:$0xf]
  %v416 = vld [vmem:[%s4 + $0x1c] sm:$0xf]
  %v417 = vld [vmem:[%s4 + $0x20] sm:$0xf]
  %v418 = vld [vmem:[%s4 + $0x24] sm:$0xf]
  %v419 = vld [vmem:[%s4 + $0x28] sm:$0xf]
  %v420 = vld [vmem:[%s4 + $0x2c] sm:$0xf]
  %v421 = vld [vmem:[%s4 + $0x30] sm:$0xf]
  %v422 = vld [vmem:[%s4 + $0x34] sm:$0xf]
  %v423 = vld [vmem:[%s4 + $0x38] sm:$0xf]
  %v424 = vld [vmem:[%s4 + $0x3c] sm:$0xf]
  %v441 = vunpack.c.l.b16 %v409
  %v442 = vunpack.c.l.b16 %v410
  %v443 = vunpack.c.l.b16 %v411
  %v444 = vunpack.c.l.b16 %v412
  %v445 = vunpack.c.l.b16 %v413
  %v446 = vunpack.c.l.b16 %v414
  %v447 = vunpack.c.l.b16 %v415
  %v448 = vunpack.c.l.b16 %v416
  %v449 = vunpack.c.l.b16 %v417
  %v450 = vunpack.c.l.b16 %v418
  %v451 = vunpack.c.l.b16 %v419
  %v452 = vunpack.c.l.b16 %v420
  %v453 = vunpack.c.l.b16 %v421
  %v454 = vunpack.c.l.b16 %v422
  %v455 = vunpack.c.l.b16 %v423
  %v456 = vunpack.c.l.b16 %v424
  %v457 = vpack.c.b16 %v442, %v441
  %v458 = vpack.c.b16 %v444, %v443
  %v459 = vpack.c.b16 %v446, %v445
  %v460 = vpack.c.b16 %v448, %v447
  %v461 = vpack.c.b16 %v450, %v449
  %v462 = vpack.c.b16 %v452, %v451
  %v463 = vpack.c.b16 %v454, %v453
  %v464 = vpack.c.b16 %v456, %v455
  %473 = vmatprep.subr.bf16.mxu0 0
  %474 = vmatpush1.bf16.msra.mxu0 %v457
  %475 = vmatprep.subr.bf16.mxu0 0
  %476 = vmatpush1.bf16.msra.mxu0 %v458
  %477 = vmatprep.subr.bf16.mxu0 0
  %478 = vmatpush1.bf16.msra.mxu0 %v459
  %479 = vmatprep.subr.bf16.mxu0 0
  %480 = vmatpush1.bf16.msra.mxu0 %v460
  %481 = vmatprep.subr.bf16.mxu0 0
  %482 = vmatpush1.bf16.msra.mxu0 %v461
  %483 = vmatprep.subr.bf16.mxu0 0
  %484 = vmatpush1.bf16.msra.mxu0 %v462
  %485 = vmatprep.subr.bf16.mxu0 0
  %486 = vmatpush1.bf16.msra.mxu0 %v463
  %487 = vmatprep.subr.bf16.mxu0 0
  %488 = vmatpush1.bf16.msra.mxu0 %v464
  %489 = vmatprep.subr.bf16.mxu0 0
  %490 = vmatpush1.bf16.msra.mxu0 0
  %491 = vmatprep.subr.bf16.mxu0 0
  %492 = vmatpush1.bf16.msra.mxu0 0
  %493 = vmatprep.subr.bf16.mxu0 0
  %494 = vmatpush1.bf16.msra.mxu0 0
  %495 = vmatprep.subr.bf16.mxu0 0
  %496 = vmatpush1.bf16.msra.mxu0 0
  %497 = vmatprep.subr.bf16.mxu0 0
  %498 = vmatpush1.bf16.msra.mxu0 0
  %499 = vmatprep.subr.bf16.mxu0 0
  %500 = vmatpush1.bf16.msra.mxu0 0
  %501 = vmatprep.subr.bf16.mxu0 0
  %502 = vmatpush1.bf16.msra.mxu0 0
  %503 = vmatprep.subr.bf16.mxu0 0
  %504 = vmatpush1.bf16.msra.mxu0 0
  %505 = vmatprep.mubr.bf16.mxu0 0
  %506 = vmatmul.mubr.bf16.gmra.mrb[0].mxu0 %v408
  %v507 = vpop.f32.mrb[0].mxu0
  %v508 = vadd.f32 0.0, %v507
  %v509 = vpop.f32.mrb[0].mxu0
  %v510 = vpop.f32.mrb[0].mxu0
  %v511 = vadd.f32 0.0, %v510
  %v512 = vpop.f32.mrb[0].mxu0
  %513 = vdwg.mxu0
  %v514 = vmul.f32 %v508, %v508
  %v515 = vmul.f32 %v511, %v511
  %516 = vadd.xlane.f32.xlu0 %v514
  %v517 = vpop.xlane.xlu0 %516
  %518 = vadd.xlane.f32.xlu0 %v515
  %v519 = vpop.xlane.xlu0 %518
  %v520 = vadd.f32 %v517, 1e-12
  %v521 = vadd.f32 %v519, 1e-12
  %v522 = vrsqrt.pop %v520
  %v523 = vrsqrt.pop %v521
  %v524 = vmul.f32 %v508, %v522
  %v525 = vmul.f32 %v511, %v523
  %526 = vst [vmem:[%s8] sm:$0xff] %v524
  %527 = vst [vmem:[%s8 + $0x8] sm:$0xff] %v525
  %v528 = vld [vmem:[%s5] sm:$0xf]
  %v529 = vld [vmem:[%s5 + $0x4] sm:$0xf]
  %v530 = vld [vmem:[%s6] sm:$0xf]
  %v531 = vld [vmem:[%s6 + $0x4] sm:$0xf]
  %v532 = vld [vmem:[%s6 + $0x8] sm:$0xf]
  %v533 = vld [vmem:[%s6 + $0xc] sm:$0xf]
  %v534 = vld [vmem:[%s6 + $0x10] sm:$0xf]
  %v535 = vld [vmem:[%s6 + $0x14] sm:$0xf]
  %v536 = vld [vmem:[%s6 + $0x18] sm:$0xf]
  %v537 = vld [vmem:[%s6 + $0x1c] sm:$0xf]
  %v538 = vld [vmem:[%s6 + $0x20] sm:$0xf]
  %v539 = vld [vmem:[%s6 + $0x24] sm:$0xf]
  %v540 = vld [vmem:[%s6 + $0x28] sm:$0xf]
  %v541 = vld [vmem:[%s6 + $0x2c] sm:$0xf]
  %v542 = vld [vmem:[%s6 + $0x30] sm:$0xf]
  %v543 = vld [vmem:[%s6 + $0x34] sm:$0xf]
  %v544 = vld [vmem:[%s6 + $0x38] sm:$0xf]
  %v545 = vld [vmem:[%s6 + $0x3c] sm:$0xf]
  %v548 = vunpack.c.l.b16 %v528
  %v549 = vunpack.c.l.b16 %v529
  %v550 = vpack.c.b16 %v549, %v548
  %v568 = vunpack.c.l.b16 %v530
  %v569 = vunpack.c.l.b16 %v531
  %v570 = vunpack.c.l.b16 %v532
  %v571 = vunpack.c.l.b16 %v533
  %v572 = vunpack.c.l.b16 %v534
  %v573 = vunpack.c.l.b16 %v535
  %v574 = vunpack.c.l.b16 %v536
  %v575 = vunpack.c.l.b16 %v537
  %v576 = vunpack.c.l.b16 %v538
  %v577 = vunpack.c.l.b16 %v539
  %v578 = vunpack.c.l.b16 %v540
  %v579 = vunpack.c.l.b16 %v541
  %v580 = vunpack.c.l.b16 %v542
  %v581 = vunpack.c.l.b16 %v543
  %v582 = vunpack.c.l.b16 %v544
  %v583 = vunpack.c.l.b16 %v545
  %v584 = vpack.c.b16 %v569, %v568
  %v585 = vpack.c.b16 %v571, %v570
  %v586 = vpack.c.b16 %v573, %v572
  %v587 = vpack.c.b16 %v575, %v574
  %v588 = vpack.c.b16 %v577, %v576
  %v589 = vpack.c.b16 %v579, %v578
  %v590 = vpack.c.b16 %v581, %v580
  %v591 = vpack.c.b16 %v583, %v582
  %600 = vmatprep.subr.bf16.mxu0 0
  %601 = vmatpush1.bf16.msra.mxu0 %v584
  %602 = vmatprep.subr.bf16.mxu0 0
  %603 = vmatpush1.bf16.msra.mxu0 %v585
  %604 = vmatprep.subr.bf16.mxu0 0
  %605 = vmatpush1.bf16.msra.mxu0 %v586
  %606 = vmatprep.subr.bf16.mxu0 0
  %607 = vmatpush1.bf16.msra.mxu0 %v587
  %608 = vmatprep.subr.bf16.mxu0 0
  %609 = vmatpush1.bf16.msra.mxu0 %v588
  %610 = vmatprep.subr.bf16.mxu0 0
  %611 = vmatpush1.bf16.msra.mxu0 %v589
  %612 = vmatprep.subr.bf16.mxu0 0
  %613 = vmatpush1.bf16.msra.mxu0 %v590
  %614 = vmatprep.subr.bf16.mxu0 0
  %615 = vmatpush1.bf16.msra.mxu0 %v591
  %616 = vmatprep.subr.bf16.mxu0 0
  %617 = vmatpush1.bf16.msra.mxu0 0
  %618 = vmatprep.subr.bf16.mxu0 0
  %619 = vmatpush1.bf16.msra.mxu0 0
  %620 = vmatprep.subr.bf16.mxu0 0
  %621 = vmatpush1.bf16.msra.mxu0 0
  %622 = vmatprep.subr.bf16.mxu0 0
  %623 = vmatpush1.bf16.msra.mxu0 0
  %624 = vmatprep.subr.bf16.mxu0 0
  %625 = vmatpush1.bf16.msra.mxu0 0
  %626 = vmatprep.subr.bf16.mxu0 0
  %627 = vmatpush1.bf16.msra.mxu0 0
  %628 = vmatprep.subr.bf16.mxu0 0
  %629 = vmatpush1.bf16.msra.mxu0 0
  %630 = vmatprep.subr.bf16.mxu0 0
  %631 = vmatpush1.bf16.msra.mxu0 0
  %632 = vmatprep.mubr.bf16.mxu0 0
  %633 = vmatmul.mubr.bf16.gmra.mrb[0].mxu0 %v550
  %v634 = vpop.f32.mrb[0].mxu0
  %v635 = vadd.f32 0.0, %v634
  %v636 = vpop.f32.mrb[0].mxu0
  %v637 = vpop.f32.mrb[0].mxu0
  %v638 = vadd.f32 0.0, %v637
  %v639 = vpop.f32.mrb[0].mxu0
  %640 = vdwg.mxu0
  %v641 = vpack.c.bf16 %v638, %v635
  %v642 = vld [vmem:[%s7] sm:$0xf]
  %v643 = vld [vmem:[%s7 + $0x4] sm:$0xf]
  %v644 = vld [vmem:[%s7 + $0x8] sm:$0xf]
  %v645 = vld [vmem:[%s7 + $0xc] sm:$0xf]
  %v646 = vld [vmem:[%s7 + $0x10] sm:$0xf]
  %v647 = vld [vmem:[%s7 + $0x14] sm:$0xf]
  %v648 = vld [vmem:[%s7 + $0x18] sm:$0xf]
  %v649 = vld [vmem:[%s7 + $0x1c] sm:$0xf]
  %v650 = vld [vmem:[%s7 + $0x20] sm:$0xf]
  %v651 = vld [vmem:[%s7 + $0x24] sm:$0xf]
  %v652 = vld [vmem:[%s7 + $0x28] sm:$0xf]
  %v653 = vld [vmem:[%s7 + $0x2c] sm:$0xf]
  %v654 = vld [vmem:[%s7 + $0x30] sm:$0xf]
  %v655 = vld [vmem:[%s7 + $0x34] sm:$0xf]
  %v656 = vld [vmem:[%s7 + $0x38] sm:$0xf]
  %v657 = vld [vmem:[%s7 + $0x3c] sm:$0xf]
  %v674 = vunpack.c.l.b16 %v642
  %v675 = vunpack.c.l.b16 %v643
  %v676 = vunpack.c.l.b16 %v644
  %v677 = vunpack.c.l.b16 %v645
  %v678 = vunpack.c.l.b16 %v646
  %v679 = vunpack.c.l.b16 %v647
  %v680 = vunpack.c.l.b16 %v648
  %v681 = vunpack.c.l.b16 %v649
  %v682 = vunpack.c.l.b16 %v650
  %v683 = vunpack.c.l.b16 %v651
  %v684 = vunpack.c.l.b16 %v652
  %v685 = vunpack.c.l.b16 %v653
  %v686 = vunpack.c.l.b16 %v654
  %v687 = vunpack.c.l.b16 %v655
  %v688 = vunpack.c.l.b16 %v656
  %v689 = vunpack.c.l.b16 %v657
  %v690 = vpack.c.b16 %v675, %v674
  %v691 = vpack.c.b16 %v677, %v676
  %v692 = vpack.c.b16 %v679, %v678
  %v693 = vpack.c.b16 %v681, %v680
  %v694 = vpack.c.b16 %v683, %v682
  %v695 = vpack.c.b16 %v685, %v684
  %v696 = vpack.c.b16 %v687, %v686
  %v697 = vpack.c.b16 %v689, %v688
  %706 = vmatprep.subr.bf16.mxu0 0
  %707 = vmatpush1.bf16.msra.mxu0 %v690
  %708 = vmatprep.subr.bf16.mxu0 0
  %709 = vmatpush1.bf16.msra.mxu0 %v691
  %710 = vmatprep.subr.bf16.mxu0 0
  %711 = vmatpush1.bf16.msra.mxu0 %v692
  %712 = vmatprep.subr.bf16.mxu0 0
  %713 = vmatpush1.bf16.msra.mxu0 %v693
  %714 = vmatprep.subr.bf16.mxu0 0
  %715 = vmatpush1.bf16.msra.mxu0 %v694
  %716 = vmatprep.subr.bf16.mxu0 0
  %717 = vmatpush1.bf16.msra.mxu0 %v695
  %718 = vmatprep.subr.bf16.mxu0 0
  %719 = vmatpush1.bf16.msra.mxu0 %v696
  %720 = vmatprep.subr.bf16.mxu0 0
  %721 = vmatpush1.bf16.msra.mxu0 %v697
  %722 = vmatprep.subr.bf16.mxu0 0
  %723 = vmatpush1.bf16.msra.mxu0 0
  %724 = vmatprep.subr.bf16.mxu0 0
  %725 = vmatpush1.bf16.msra.mxu0 0
  %726 = vmatprep.subr.bf16.mxu0 0
  %727 = vmatpush1.bf16.msra.mxu0 0
  %728 = vmatprep.subr.bf16.mxu0 0
  %729 = vmatpush1.bf16.msra.mxu0 0
  %730 = vmatprep.subr.bf16.mxu0 0
  %731 = vmatpush1.bf16.msra.mxu0 0
  %732 = vmatprep.subr.bf16.mxu0 0
  %733 = vmatpush1.bf16.msra.mxu0 0
  %734 = vmatprep.subr.bf16.mxu0 0
  %735 = vmatpush1.bf16.msra.mxu0 0
  %736 = vmatprep.subr.bf16.mxu0 0
  %737 = vmatpush1.bf16.msra.mxu0 0
  %738 = vmatprep.mubr.bf16.mxu0 0
  %739 = vmatmul.mubr.bf16.gmra.mrb[0].mxu0 %v641
  %v740 = vpop.f32.mrb[0].mxu0
  %v741 = vadd.f32 0.0, %v740
  %v742 = vpop.f32.mrb[0].mxu0
  %v743 = vpop.f32.mrb[0].mxu0
  %v744 = vadd.f32 0.0, %v743
  %v745 = vpop.f32.mrb[0].mxu0
  %746 = vdwg.mxu0
  %v747 = vmul.f32 %v741, %v741
  %v748 = vmul.f32 %v744, %v744
  %749 = vadd.xlane.f32.xlu0 %v747
  %v750 = vpop.xlane.xlu0 %749
  %751 = vadd.xlane.f32.xlu0 %v748
  %v752 = vpop.xlane.xlu0 %751
  %v753 = vadd.f32 %v750, 1e-12
  %v754 = vadd.f32 %v752, 1e-12
  %v755 = vrsqrt.pop %v753
  %v756 = vrsqrt.pop %v754
  %v757 = vmul.f32 %v741, %v755
  %v758 = vmul.f32 %v744, %v756
  %759 = vst [vmem:[%s9] sm:$0xff] %v757
  %760 = vst [vmem:[%s9 + $0x8] sm:$0xff] %v758
  // Predicated region
  $region34: #{biomedclip_forward.1} parent=0 // pred_check
    _
  $region35: #{biomedclip_forward.1} parent=0 // pred_check_branch
    %762 = sbr.rel (0) target = $region37
  $region36: #{biomedclip_forward.1} parent=0 // pred_region
    _
  $region37: #{biomedclip_forward.1} parent=0 // pred_fallthru
    _
  // Predicated region
  $region38: #{biomedclip_forward.1} parent=0 // pred_check
    _
  $region39: #{biomedclip_forward.1} parent=0 // pred_check_branch
    %764 = sbr.rel (0) target = $region41
  $region40: #{biomedclip_forward.1} parent=0 // pred_region
    _
  $region41: #{biomedclip_forward.1} parent=0 // pred_fallthru
    _
  // Predicated region
  $region42: #{biomedclip_forward.1} parent=0 // pred_check
    _
  $region43: #{biomedclip_forward.1} parent=0 // pred_check_branch
    %766 = sbr.rel (0) target = $region45
  $region44: #{biomedclip_forward.1} parent=0 // pred_region
    _
  $region45: #{biomedclip_forward.1} parent=0 // pred_fallthru
    _
  // Predicated region
  $region46: #{biomedclip_forward.1} parent=0 // pred_check
    _
  $region47: #{biomedclip_forward.1} parent=0 // pred_check_branch
    %768 = sbr.rel (0) target = $region49
  $region48: #{biomedclip_forward.1} parent=0 // pred_region
    _
  $region49: #{biomedclip_forward.1} parent=0 // pred_fallthru
    _

</llo_original>
